<compile_context>
chip_gen: v6e
topology: v6e:2x2x1
jax: 0.10.0
libtpu: 0.0.40
codegen_flags: <defaults>
</compile_context>

<pallas_src>
import jax
import jax.numpy as jnp
from jax.experimental import pallas as pl
from jax.experimental.pallas import tpu as pltpu

_LANE = 128
_SUBLANE = 8


def _round_up(n, m):
    return ((n + m - 1) // m) * m


def linear_kernel(x_ref, w_ref, b_ref, o_ref):
    # x_ref: [TB, D_in] (bf16), w_ref: [D_in, N_pad] (bf16),
    # b_ref: [1, N_pad] (f32), o_ref: [TB, N_pad]
    acc = jnp.dot(x_ref[...], w_ref[...], preferred_element_type=jnp.float32)
    o_ref[...] = (acc + b_ref[...]).astype(o_ref.dtype)


def linear_forward(x, w_t, b, *, block_b=256, out_dtype=jnp.float32):
    """Linear layer forward.

    x:   [B, D_in]
    w_t: [D_in, D_out]  (torch weight transposed)
    b:   [D_out]
    returns [B, D_out] in `out_dtype`.
    """
    B, D_in = x.shape
    D_out = w_t.shape[1]

    # Lane-dense output: pad the class axis up to a multiple of 128.
    n_pad = _round_up(D_out, _LANE)
    # Batch tile: multiple of the sublane count, capped at block_b.
    tb = min(_round_up(block_b, _SUBLANE), _round_up(B, _SUBLANE))
    b_pad = _round_up(B, tb)

    x_p = x if b_pad == B else jnp.pad(x, ((0, b_pad - B), (0, 0)))
    b2d = b.reshape(1, D_out).astype(jnp.float32)
    w_p = w_t
    if n_pad != D_out:
        w_p = jnp.pad(w_t, ((0, 0), (0, n_pad - D_out)))
        b2d = jnp.pad(b2d, ((0, 0), (0, n_pad - D_out)))

    # MXU-native input width; accumulation stays f32 inside the kernel.
    x_p = x_p.astype(jnp.bfloat16)
    w_p = w_p.astype(jnp.bfloat16)

    grid = (b_pad // tb,)
    cost = pl.CostEstimate(
        flops=2 * b_pad * D_in * n_pad,
        transcendentals=0,
        bytes_accessed=(x_p.size * 2 + w_p.size * 2 + b2d.size * 4
                        + b_pad * n_pad * jnp.dtype(out_dtype).itemsize),
    )

    out = pl.pallas_call(
        linear_kernel,
        out_shape=jax.ShapeDtypeStruct((b_pad, n_pad), out_dtype),
        grid=grid,
        in_specs=[
            pl.BlockSpec((tb, D_in), lambda i: (i, 0)),      # x: tiled over batch
            pl.BlockSpec((D_in, n_pad), lambda i: (0, 0)),   # W: VMEM-resident
            pl.BlockSpec((1, n_pad), lambda i: (0, 0)),      # b: VMEM-resident
        ],
        out_specs=pl.BlockSpec((tb, n_pad), lambda i: (i, 0)),
        compiler_params=pltpu.CompilerParams(
            dimension_semantics=("parallel",),
        ),
        cost_estimate=cost,
    )(x_p, w_p, b2d)

    # Strip batch / class padding.
    return out[:B, :D_out]

# TODO(synk): if D_in / D_out grow large, add an N tile (VMEM-budgeted for
# v7x's 64 MiB) and a trailing "arbitrary" K axis with a f32 VMEM accumulator.


if __name__ == "__main__":
    # Shapes consistent with the module: input_dim=32, output_dim=16, batch=8.
    B, D_in, D_out = 8, 32, 16
    key = jax.random.PRNGKey(0)
    kx, kw, kb = jax.random.split(key, 3)

    # Deterministic init mimicking torch.nn.Linear default:
    # U(-1/sqrt(D_in), 1/sqrt(D_in)) for weight and bias.
    bound = 1.0 / jnp.sqrt(jnp.float32(D_in))
    w = jax.random.uniform(kw, (D_out, D_in), jnp.float32, -bound, bound)  # torch [out, in]
    b = jax.random.uniform(kb, (D_out,), jnp.float32, -bound, bound)
    x = jax.random.normal(kx, (B, D_in), jnp.float32)

    y = linear_forward(x, w.T, b)
    y = jax.block_until_ready(y)
    assert y.shape == (B, D_out)

    # Reference with the same bf16 input quantization, f32 accumulation.
    x_q = x.astype(jnp.bfloat16).astype(jnp.float32)
    w_q = w.astype(jnp.bfloat16).astype(jnp.float32)
    y_ref = x_q @ w_q.T + b
    assert jnp.allclose(y, y_ref, atol=1e-3, rtol=1e-3), "mismatch vs bf16 reference"

    # Loose sanity check against the full-precision torch-equivalent math.
    y_f32 = x @ w.T + b
    assert jnp.allclose(y, y_f32, atol=2e-2, rtol=2e-2), "mismatch vs f32 reference"

    print("KERNEL_OK")
</pallas_src>

<mosaic_0001>
module attributes {stable_mosaic.version = 11 : i64} {
  func.func @linear_kernel(%arg0: i32, %arg1: memref<8x32xbf16, #tpu.memory_space<vmem>>, %arg2: memref<32x128xbf16, #tpu.memory_space<vmem>>, %arg3: memref<1x128xf32, #tpu.memory_space<vmem>>, %arg4: memref<8x128xf32, #tpu.memory_space<vmem>>) attributes {dimension_semantics = [#tpu.dimension_semantics<parallel>], iteration_bounds = array<i64: 1>, scalar_prefetch = 0 : i64, scratch_operands = 0 : i64, tpu.core_type = #tpu.core_type<tc>, window_params = [{transform_indices = @transform_0, window_bounds = array<i64: 8, 32>}, {pipeline_mode = #tpu.pipeline_mode<synchronous>, transform_indices = @transform_1, window_bounds = array<i64: 32, 128>}, {pipeline_mode = #tpu.pipeline_mode<synchronous>, transform_indices = @transform_2, window_bounds = array<i64: 1, 128>}, {transform_indices = @transform_3, window_bounds = array<i64: 8, 128>}]} {
    %c0 = arith.constant 0 : index
    %c0_0 = arith.constant 0 : index
    %0 = vector.load %arg1[%c0, %c0_0] : memref<8x32xbf16, #tpu.memory_space<vmem>>, vector<8x32xbf16>
    %c0_1 = arith.constant 0 : index
    %c0_2 = arith.constant 0 : index
    %1 = vector.load %arg2[%c0_1, %c0_2] : memref<32x128xbf16, #tpu.memory_space<vmem>>, vector<32x128xbf16>
    %cst = arith.constant dense<0.000000e+00> : vector<8x128xf32>
    %2 = tpu.matmul %0, %1, %cst {dimension_numbers = #tpu.dot_dimension_numbers<[1], [0], [0], [1], [0, 0, 1, 1], [], []>} : vector<8x32xbf16>, vector<32x128xbf16>, vector<8x128xf32> -> vector<8x128xf32>
    %c0_3 = arith.constant 0 : index
    %c0_4 = arith.constant 0 : index
    %3 = vector.load %arg3[%c0_3, %c0_4] : memref<1x128xf32, #tpu.memory_space<vmem>>, vector<1x128xf32>
    %4 = vector.broadcast %3 : vector<1x128xf32> to vector<8x128xf32>
    %5 = arith.addf %2, %4 : vector<8x128xf32>
    %c0_5 = arith.constant 0 : index
    %c0_6 = arith.constant 0 : index
    %6 = vector.load %arg4[%c0_5, %c0_6] : memref<8x128xf32, #tpu.memory_space<vmem>>, vector<8x128xf32>
    tpu.vector_store %arg4[%c0_5, %c0_6], %5 {strides = array<i32>} : memref<8x128xf32, #tpu.memory_space<vmem>>, vector<8x128xf32>,
    return
  }
  func.func @transform_0(%arg0: i32) -> (i32, i32) {
    %c0_i32 = arith.constant 0 : i32
    %c0_i32_0 = arith.constant 0 : i32
    return %arg0, %c0_i32 : i32, i32
  }
  func.func @transform_1(%arg0: i32) -> (i32, i32) {
    %c0_i32 = arith.constant 0 : i32
    %c0_i32_0 = arith.constant 0 : i32
    %c0_i32_1 = arith.constant 0 : i32
    return %c0_i32, %c0_i32_0 : i32, i32
  }
  func.func @transform_2(%arg0: i32) -> (i32, i32) {
    %c0_i32 = arith.constant 0 : i32
    %c0_i32_0 = arith.constant 0 : i32
    %c0_i32_1 = arith.constant 0 : i32
    return %c0_i32, %c0_i32_0 : i32, i32
  }
  func.func @transform_3(%arg0: i32) -> (i32, i32) {
    %c0_i32 = arith.constant 0 : i32
    %c0_i32_0 = arith.constant 0 : i32
    return %arg0, %c0_i32 : i32, i32
  }
}

</mosaic_0001>

<llo_original>
// kernel: tpu_custom_call.1
$region0: #{tpu_custom_call.1}
  #allocation0 [shape = 'u32[]', space=smem, size = 0x4, offset = 0x4, fixed_abs, tag = 'smem constant byte address 0x4 - core index']
  #allocation1 [shape = 'u32[144,128]{1,0:T(1,128)}', space=vmem, size = 0x12000, scoped, tag = 'internal scratch']
  %s0 = inlined_call_operand.hbm [shape: bf16[8,32], index: 0, kind: input, shape index: {}]
  %s1 = inlined_call_operand.hbm [shape: bf16[32,128], index: 1, kind: input, shape index: {}]
  %s2 = inlined_call_operand.vmem [shape: f32[1,128], index: 2, kind: input, shape index: {}]
  %s3 = inlined_call_operand.hbm [shape: f32[8,128], index: 3, kind: output, shape index: {}]
  %s4 = sld [smem:[#allocation0]]
  $region30: #{tpu_custom_call.1} parent=0
    _
  %s6 = ssub.s32 1, %s4
  %s7 = scalar_select 0, %s6, %s4
  $region1: #{tpu_custom_call.1} parent=0
    #allocation2 [shape = 'u8[2048]{0}', space=vmem, size = 0x800, scoped, tag = 'input window, operand 0, single buffered']
    #allocation3 [shape = 's32[1]{0}', space=sflag, size = 0x4, scoped, tag = 'scoped memory for tpu_custom_call.1']
    #allocation4 [shape = 's32[1]{0}', space=sflag, size = 0x4, scoped, tag = 'scoped memory for tpu_custom_call.1']
    #allocation5 [shape = 'u8[8192]{0}', space=vmem, size = 0x2000, scoped, tag = 'input window, operand 1, single buffered']
    #allocation6 [shape = 's32[1]{0}', space=sflag, size = 0x4, scoped, tag = 'scoped memory for tpu_custom_call.1']
    #allocation7 [shape = 'u8[4096]{0}', space=vmem, size = 0x1000, scoped, tag = 'output window, operand 0, single buffered']
    %8 = vsyncpa [#allocation3], 0
    %9 = vsyncpa [#allocation6], 0
    %10 = vsyncpa [#allocation4], 0
    // Predicated region
    $region2: #{tpu_custom_call.1} parent=1 // pred_check
      _
    $region3: #{tpu_custom_call.1} parent=1 // pred_check_branch
      %12 = sbr.rel (0) target = $region5
    $region4: #{tpu_custom_call.1} parent=1 // pred_region
      %s14 = ssub.s32 64, 64
      %15 = vsyncadd [#allocation3], %s14
      %s17 = sshll.u32 [#allocation2], 4
      %s18 = int_to_ptr.vmem [resolvable:$true] %s17
      %20 = dma.hbm_to_vmem [thread:$0]  %s0, 64, %s18, [#allocation3]
    $region5: #{tpu_custom_call.1} parent=1 // pred_fallthru
      _
    // Predicated region
    $region6: #{tpu_custom_call.1} parent=1 // pred_check
      _
    $region7: #{tpu_custom_call.1} parent=1 // pred_check_branch
      %22 = sbr.rel (0) target = $region9
    $region8: #{tpu_custom_call.1} parent=1 // pred_region
      %s24 = ssub.s32 256, 256
      %25 = vsyncadd [#allocation6], %s24
      %s26 = sshll.u32 [#allocation5], 4
      %s27 = int_to_ptr.vmem [resolvable:$true] %s26
      %32 = dma.hbm_to_vmem [thread:$0]  %s1, 256, %s27, [#allocation6], 64, 64, 4
    $region9: #{tpu_custom_call.1} parent=1 // pred_fallthru
      _
    // Predicated region
    $region10: #{tpu_custom_call.1} parent=1 // pred_check
      _
    $region11: #{tpu_custom_call.1} parent=1 // pred_check_branch
      %34 = sbr.rel (0) target = $region13
    $region12: #{tpu_custom_call.1} parent=1 // pred_region
      _
    $region13: #{tpu_custom_call.1} parent=1 // pred_fallthru
      _
    // Predicated region
    $region14: #{tpu_custom_call.1} parent=1 // pred_check
      _
    $region15: #{tpu_custom_call.1} parent=1 // pred_check_branch
      %36 = sbr.rel (0) target = $region17
    $region16: #{tpu_custom_call.1} parent=1 // pred_region
      %37 = dma.done [#allocation3], 64
    $region17: #{tpu_custom_call.1} parent=1 // pred_fallthru
      _
    // Predicated region
    $region18: #{tpu_custom_call.1} parent=1 // pred_check
      _
    $region19: #{tpu_custom_call.1} parent=1 // pred_check_branch
      %39 = sbr.rel (0) target = $region21
    $region20: #{tpu_custom_call.1} parent=1 // pred_region
      %40 = dma.done [#allocation6], 256
    $region21: #{tpu_custom_call.1} parent=1 // pred_fallthru
      _
    %v42 = vld [vmem:[#allocation2] sm:$0xf]
    %v43 = vld [vmem:[#allocation5] sm:$0xf]
    %v44 = vld [vmem:[#allocation5 + $0x4] sm:$0xf]
    %v45 = vld [vmem:[#allocation5 + $0x8] sm:$0xf]
    %v46 = vld [vmem:[#allocation5 + $0xc] sm:$0xf]
    %v47 = vld [vmem:[%s2] sm:$0x1]
    %v49 = vlaneseq
    %v50 = vshrl.u32 %v49, 7
    %v51 = vsub.s32 0, %v50
    %v52 = vrot.slane %v47, %v51
    %v58 = vunpack.c.l.b16 %v43
    %v59 = vunpack.c.l.b16 %v44
    %v60 = vunpack.c.l.b16 %v45
    %v61 = vunpack.c.l.b16 %v46
    %v62 = vpack.c.b16 %v59, %v58
    %v63 = vpack.c.b16 %v61, %v60
    %vm66 = vcmask 261120
    %v68 = vsel %vm66, %v42, 0
    %70 = vmatprep.subr.bf16.mxu0 0
    %71 = vmatpush1.bf16.msra.mxu0 0
    %72 = vmatprep.subr.bf16.mxu0 0
    %73 = vmatpush1.bf16.msra.mxu0 0
    %74 = vmatprep.subr.bf16.mxu0 0
    %75 = vmatpush1.bf16.msra.mxu0 0
    %76 = vmatprep.subr.bf16.mxu0 0
    %77 = vmatpush1.bf16.msra.mxu0 0
    %78 = vmatprep.subr.bf16.mxu0 0
    %79 = vmatpush1.bf16.msra.mxu0 0
    %80 = vmatprep.subr.bf16.mxu0 0
    %81 = vmatpush1.bf16.msra.mxu0 0
    %82 = vmatprep.subr.bf16.mxu0 0
    %83 = vmatpush1.bf16.msra.mxu0 %v63
    %84 = vmatprep.subr.bf16.mxu0 0
    %85 = vmatpush1.bf16.msra.mxu0 %v62
    %86 = vmatprep.subr.bf16.mxu0 0
    %87 = vmatpush2.bf16.msra.mxu0 0
    %88 = vmatprep.subr.bf16.mxu0 0
    %89 = vmatpush2.bf16.msra.mxu0 0
    %90 = vmatprep.subr.bf16.mxu0 0
    %91 = vmatpush2.bf16.msra.mxu0 0
    %92 = vmatprep.subr.bf16.mxu0 0
    %93 = vmatpush2.bf16.msra.mxu0 0
    %94 = vmatprep.subr.bf16.mxu0 0
    %95 = vmatpush2.bf16.msra.mxu0 0
    %96 = vmatprep.subr.bf16.mxu0 0
    %97 = vmatpush2.bf16.msra.mxu0 0
    %98 = vmatprep.subr.bf16.mxu0 0
    %99 = vmatpush2.bf16.msra.mxu0 0
    %100 = vmatprep.subr.bf16.mxu0 0
    %101 = vmatpush2.bf16.msra.mxu0 0
    %102 = vmatprep.mubr.bf16.mxu0 0
    %103 = vmatmul.mubr.bf16.gmra.mxu0 %v68
    %v104 = vpop.f32.mrf.mxu0
    %v105 = vadd.f32 %v52, %v104
    %v106 = vpop.f32.mrf.mxu0
    %v107 = vpop.f32.mrf.mxu0
    %v108 = vpop.f32.mrf.mxu0
    %109 = vdwg.mxu0
    %110 = vst [vmem:[#allocation7] sm:$0xff] %v105
    // Predicated region
    $region22: #{tpu_custom_call.1} parent=1 // pred_check
      _
    $region23: #{tpu_custom_call.1} parent=1 // pred_check_branch
      %112 = sbr.rel (0) target = $region25
    $region24: #{tpu_custom_call.1} parent=1 // pred_region
      %s114 = ssub.s32 128, 128
      %115 = vsyncadd [#allocation4], %s114
      %s117 = sshll.u32 [#allocation7], 4
      %s118 = int_to_ptr.vmem [resolvable:$true] %s117
      %120 = dma.vmem_to_hbm [thread:$0]  %s118, 128, %s3, [#allocation4]
    $region25: #{tpu_custom_call.1} parent=1 // pred_fallthru
      _
    // Predicated region
    $region26: #{tpu_custom_call.1} parent=1 // pred_check
      _
    $region27: #{tpu_custom_call.1} parent=1 // pred_check_branch
      %122 = sbr.rel (0) target = $region29
    $region28: #{tpu_custom_call.1} parent=1 // pred_region
      %123 = dma.done [#allocation4], 128
    $region29: #{tpu_custom_call.1} parent=1 // pred_fallthru
      _
    %124 = vsyncpa [#allocation3], 1
    %125 = vsyncpa [#allocation6], 1
    %126 = vsyncpa [#allocation4], 1

</llo_original>
